<compile_context>
chip_gen: v5e
topology: v5e:2x2
jax: 0.10.0
libtpu: 0.0.40
codegen_flags: <defaults>
</compile_context>

<pallas_src>
import jax
import jax.numpy as jnp
from jax import lax
from jax.experimental import pallas as pl
from jax.experimental.pallas import tpu as pltpu


def _round_up(a, b):
    return ((a + b - 1) // b) * b


def _vmem_budget_bytes():
    """Generation-aware VMEM budget (~70% of physical VMEM)."""
    try:
        cap = int(pltpu.get_tpu_info().vmem_capacity_bytes)
    except Exception:
        cap = 64 * 1024 * 1024          # conservative fallback: v7x physical VMEM
    return int(0.70 * cap)


def _stable_softplus(r):
    # softplus(r) = max(r, 0) + log1p(exp(-|r|))  -- no overflow for large r.
    return jnp.maximum(r, 0.0) + jnp.log1p(jnp.exp(-jnp.abs(r)))


# ---------------------------------------------------------------------------
# Kernel 1: fused weight + bias reparameterization (tiled over K_pad rows).
#   W    = W_mu + W_eps * softplus(W_rho)      -> bf16, (K_pad, O_pad)
#   bias = b_mu + b_eps * softplus(b_rho)      -> f32,  (1, O_pad)
# ---------------------------------------------------------------------------
def reparam_kernel(w_mu_ref, w_rho_ref, w_eps_ref,
                   b_mu_ref, b_rho_ref, b_eps_ref,
                   w_out_ref, b_out_ref):
    w_sigma = _stable_softplus(w_rho_ref[...])
    w_out_ref[...] = (w_mu_ref[...] + w_eps_ref[...] * w_sigma).astype(w_out_ref.dtype)

    @pl.when(pl.program_id(0) == 0)
    def _():
        b_sigma = _stable_softplus(b_rho_ref[...])
        b_out_ref[...] = b_mu_ref[...] + b_eps_ref[...] * b_sigma


def sample_weight_and_bias(w_mu, w_rho, w_eps, b_mu, b_rho, b_eps, *, vmem_budget):
    """Inputs are padded 2-D f32 arrays: W-* (K_pad, O_pad), b-* (1, O_pad)."""
    k_pad, o_pad = w_mu.shape
    tr = 512 if k_pad % 512 == 0 else (256 if k_pad % 256 == 0 else 128)
    grid = (k_pad // tr,)

    w_in_spec = pl.BlockSpec((tr, o_pad), lambda i: (i, 0))
    b_in_spec = pl.BlockSpec((1, o_pad), lambda i: (0, 0))

    return pl.pallas_call(
        reparam_kernel,
        grid=grid,
        in_specs=[w_in_spec, w_in_spec, w_in_spec,
                  b_in_spec, b_in_spec, b_in_spec],
        out_specs=(pl.BlockSpec((tr, o_pad), lambda i: (i, 0)),
                   pl.BlockSpec((1, o_pad), lambda i: (0, 0))),
        out_shape=(jax.ShapeDtypeStruct((k_pad, o_pad), jnp.bfloat16),  # W (K_pad, O_pad)
                   jax.ShapeDtypeStruct((1, o_pad), jnp.float32)),      # bias (1, O_pad)
        compiler_params=pltpu.CompilerParams(
            dimension_semantics=("arbitrary",),
            vmem_limit_bytes=vmem_budget),
    )(w_mu, w_rho, w_eps, b_mu, b_rho, b_eps)


# ---------------------------------------------------------------------------
# Kernel 2: conv as matmul with W resident in VMEM (no K reduction axis):
#   out[i, j] = patches[i, :] @ W[:, j] + bias[j]
#   patches : (M_pad, K_pad) bf16     W : (K_pad, O_pad) bf16 (resident)
#   bias    : (1, O_pad)     f32      out: (M_pad, O_pad) f32
# ---------------------------------------------------------------------------
def conv_matmul_kernel(p_ref, w_ref, b_ref, out_ref):
    out_ref[...] = (jnp.dot(p_ref[...], w_ref[...],
                            preferred_element_type=jnp.float32)
                    + b_ref[...]).astype(out_ref.dtype)


def _plan_conv_tiles(m, k_pad, o_pad, budget):
    """Pick (tm, tn) so double-buffered footprint fits the VMEM budget."""
    def footprint(tm, tn):
        # 2x bf16 W block + 2x bf16 patches block + 2x f32 out block + bias
        return 2 * (k_pad * tn * 2 + tm * k_pad * 2 + tm * tn * 4) + 4 * o_pad * 4

    if m >= 1024:
        tm = 512
    elif m >= 512:
        tm = 256
    elif m >= 256:
        tm = 128
    else:
        tm = max(16, _round_up(m, 16))
    tn = o_pad                                  # whole O resident when it fits
    while (footprint(tm, tn) > budget and tn > 128
           and (tn // 2) % 128 == 0 and o_pad % (tn // 2) == 0):
        tn //= 2
    while footprint(tm, tn) > budget and tm > 16:
        tm = max(16, tm // 2)
    return tm, tn


def conv_matmul(patches_bf16, w_bf16, bias_f32, *, tm, tn, vmem_budget):
    m_pad, k_pad = patches_bf16.shape
    _, o_pad = w_bf16.shape
    grid = (m_pad // tm, o_pad // tn)
    return pl.pallas_call(
        conv_matmul_kernel,
        grid=grid,
        in_specs=[
            pl.BlockSpec((tm, k_pad), lambda i, j: (i, 0)),   # patches tile
            pl.BlockSpec((k_pad, tn), lambda i, j: (0, j)),   # W (resident across i)
            pl.BlockSpec((1, tn), lambda i, j: (0, j)),       # bias
        ],
        out_specs=pl.BlockSpec((tm, tn), lambda i, j: (i, j)),
        out_shape=jax.ShapeDtypeStruct((m_pad, o_pad), jnp.float32),
        compiler_params=pltpu.CompilerParams(
            dimension_semantics=("parallel", "parallel"),
            vmem_limit_bytes=vmem_budget),
    )(patches_bf16, w_bf16, bias_f32)


# ---------------------------------------------------------------------------
# im2col extraction (glue, plain JAX) — matches F.conv2d semantics
# (cross-correlation, NCHW input, OIHW weight, stride / padding / dilation).
# ---------------------------------------------------------------------------
def im2col(x, kh, kw, stride, padding, dilation):
    n, c, h, w = x.shape
    x_pad = jnp.pad(x, ((0, 0), (0, 0), (padding, padding), (padding, padding)))
    oh = (h + 2 * padding - dilation * (kh - 1) - 1) // stride + 1
    ow = (w + 2 * padding - dilation * (kw - 1) - 1) // stride + 1
    cols = []
    for i in range(kh):
        for j in range(kw):
            sl = x_pad[:, :,
                       i * dilation: i * dilation + (oh - 1) * stride + 1: stride,
                       j * dilation: j * dilation + (ow - 1) * stride + 1: stride]
            cols.append(sl)                                  # (N, C, OH, OW)
    patches = jnp.stack(cols, axis=0)                        # (KH*KW, N, C, OH, OW)
    patches = jnp.transpose(patches, (1, 3, 4, 2, 0))        # (N, OH, OW, C, KH*KW)
    patches = patches.reshape(n * oh * ow, c * kh * kw)      # K column order = (c, i, j)
    return patches, oh, ow


# ---------------------------------------------------------------------------
# BBBConv2d forward (sample=True path), parameters built in-script.
# ---------------------------------------------------------------------------
class BBBConv2dPallas:
    def __init__(self, in_channels, out_channels, kernel_size,
                 stride=1, padding=0, dilation=1, bias=True, key=None):
        self.in_channels = in_channels
        self.out_channels = out_channels
        self.kernel_size = (kernel_size, kernel_size) if isinstance(kernel_size, int) else kernel_size
        self.stride = stride
        self.padding = padding
        self.dilation = dilation
        self.use_bias = bias

        kh, kw = self.kernel_size
        K = in_channels * kh * kw
        O = out_channels
        self.K, self.O = K, O
        # Lane-width padding only (never to tile multiples).
        self.K_pad = _round_up(K, 128)
        self.O_pad = _round_up(O, 128)
        self.vmem_budget = _vmem_budget_bytes()

        k = key if key is not None else jax.random.PRNGKey(0)
        k_wmu, k_wrho, k_bmu, k_brho = jax.random.split(k, 4)

        # posterior_mu_initial = (0, 0.1); posterior_rho_initial = (-5, 0.1)
        wshape = (out_channels, in_channels, kh, kw)
        self.W_mu = 0.0 + 0.1 * jax.random.normal(k_wmu, wshape, jnp.float32)
        self.W_rho = -5.0 + 0.1 * jax.random.normal(k_wrho, wshape, jnp.float32)

        # Pre-transposed (K, O) + padded copies used by the kernels (built once).
        w_mu_kxo = self.W_mu.reshape(O, K).T
        w_rho_kxo = self.W_rho.reshape(O, K).T
        kp, op = self.K_pad - K, self.O_pad - O
        self.w_mu_kxo = jnp.pad(w_mu_kxo, ((0, kp), (0, op)))
        # pad rho with a very negative value so softplus ~ 0 in padded region
        self.w_rho_kxo = jnp.pad(w_rho_kxo, ((0, kp), (0, op)), constant_values=-20.0)

        if bias:
            self.bias_mu = 0.0 + 0.1 * jax.random.normal(k_bmu, (O,), jnp.float32)
            self.bias_rho = -5.0 + 0.1 * jax.random.normal(k_brho, (O,), jnp.float32)
            self.b_mu_row = jnp.pad(self.bias_mu.reshape(1, O), ((0, 0), (0, op)))
            self.b_rho_row = jnp.pad(self.bias_rho.reshape(1, O), ((0, 0), (0, op)),
                                     constant_values=-20.0)
        else:
            self.bias_mu = None
            self.bias_rho = None
            self.b_mu_row = jnp.zeros((1, self.O_pad), jnp.float32)
            self.b_rho_row = jnp.full((1, self.O_pad), -20.0, jnp.float32)

    def __call__(self, x, eps_key, sample=True):
        kh, kw = self.kernel_size
        K, O, K_pad, O_pad = self.K, self.O, self.K_pad, self.O_pad

        if sample:
            k_we, k_be = jax.random.split(eps_key)
            w_eps = jax.random.normal(k_we, (K_pad, O_pad), jnp.float32)
            if self.use_bias:
                b_eps = jax.random.normal(k_be, (1, O_pad), jnp.float32)
            else:
                b_eps = jnp.zeros((1, O_pad), jnp.float32)
            # Fused reparameterization: W comes out already bf16, (K_pad, O_pad).
            W_kxo, bias = sample_weight_and_bias(
                self.w_mu_kxo, self.w_rho_kxo, w_eps,
                self.b_mu_row, self.b_rho_row, b_eps,
                vmem_budget=self.vmem_budget)
        else:
            W_kxo = self.w_mu_kxo.astype(jnp.bfloat16)
            bias = self.b_mu_row

        # --- conv via im2col + Pallas matmul (bf16 MXU, f32 accumulate) ---
        n = x.shape[0]
        patches, oh, ow = im2col(x.astype(jnp.bfloat16), kh, kw,
                                 self.stride, self.padding, self.dilation)
        M = patches.shape[0]
        tm, tn = _plan_conv_tiles(M, K_pad, O_pad, self.vmem_budget)
        M_pad = _round_up(M, tm)
        patches = jnp.pad(patches, ((0, M_pad - M), (0, K_pad - K)))  # stays bf16

        out_pad = conv_matmul(patches, W_kxo, bias, tm=tm, tn=tn,
                              vmem_budget=self.vmem_budget)           # (M_pad, O_pad) f32

        # Strip padding, go back to NCHW (PyTorch convention of the original module).
        out = out_pad[:M, :O].reshape(n, oh, ow, O).transpose(0, 3, 1, 2)
        return out, W_kxo, bias


# ---------------------------------------------------------------------------
# Main: run once on small deterministic inputs, verify vs lax.conv reference.
# ---------------------------------------------------------------------------
if __name__ == "__main__":
    key = jax.random.PRNGKey(0)
    k_param, k_eps, k_x = jax.random.split(key, 3)

    N, C, H, W_sp = 2, 4, 16, 16
    O, KS = 8, 3
    stride, padding, dilation = 1, 1, 1

    x = jax.random.normal(k_x, (N, C, H, W_sp), jnp.float32)

    module = BBBConv2dPallas(C, O, KS, stride=stride, padding=padding,
                             dilation=dilation, bias=True, key=k_param)
    out, W_pad_kxo, bias_pad = module(x, k_eps, sample=True)
    out = jax.block_until_ready(out)

    # Cross-check against XLA's conv using the SAME sampled (bf16-rounded)
    # weights and the bf16-rounded input that the kernel actually consumed.
    Kdim = C * KS * KS
    w_oihw = W_pad_kxo[:Kdim, :O].astype(jnp.float32).T.reshape(O, C, KS, KS)
    b_vec = bias_pad[0, :O]
    x_b = x.astype(jnp.bfloat16).astype(jnp.float32)
    ref = lax.conv_general_dilated(
        x_b, w_oihw,
        window_strides=(stride, stride),
        padding=[(padding, padding), (padding, padding)],
        rhs_dilation=(dilation, dilation),
        dimension_numbers=("NCHW", "OIHW", "NCHW"),
    ) + b_vec.reshape(1, O, 1, 1)

    assert out.shape == (N, O, H, W_sp), out.shape
    max_err = float(jnp.max(jnp.abs(out - ref)))
    assert jnp.allclose(out, ref, atol=1e-3, rtol=1e-3), max_err

    print("KERNEL_OK")
</pallas_src>

<mosaic_0001>
module attributes {stable_mosaic.version = 11 : i64} {
  func.func @reparam_kernel(%arg0: i32, %arg1: memref<128x128xf32, #tpu.memory_space<vmem>>, %arg2: memref<128x128xf32, #tpu.memory_space<vmem>>, %arg3: memref<128x128xf32, #tpu.memory_space<vmem>>, %arg4: memref<1x128xf32, #tpu.memory_space<vmem>>, %arg5: memref<1x128xf32, #tpu.memory_space<vmem>>, %arg6: memref<1x128xf32, #tpu.memory_space<vmem>>, %arg7: memref<128x128xbf16, #tpu.memory_space<vmem>>, %arg8: memref<1x128xf32, #tpu.memory_space<vmem>>) attributes {dimension_semantics = [#tpu.dimension_semantics<arbitrary>], iteration_bounds = array<i64: 1>, scalar_prefetch = 0 : i64, scratch_operands = 0 : i64, tpu.core_type = #tpu.core_type<tc>, window_params = [{transform_indices = @transform_0, window_bounds = array<i64: 128, 128>}, {transform_indices = @transform_1, window_bounds = array<i64: 128, 128>}, {transform_indices = @transform_2, window_bounds = array<i64: 128, 128>}, {pipeline_mode = #tpu.pipeline_mode<synchronous>, transform_indices = @transform_3, window_bounds = array<i64: 1, 128>}, {pipeline_mode = #tpu.pipeline_mode<synchronous>, transform_indices = @transform_4, window_bounds = array<i64: 1, 128>}, {pipeline_mode = #tpu.pipeline_mode<synchronous>, transform_indices = @transform_5, window_bounds = array<i64: 1, 128>}, {transform_indices = @transform_6, window_bounds = array<i64: 128, 128>}, {pipeline_mode = #tpu.pipeline_mode<synchronous>, transform_indices = @transform_7, window_bounds = array<i64: 1, 128>}]} {
    %c0 = arith.constant 0 : index
    %c0_0 = arith.constant 0 : index
    %0 = vector.load %arg2[%c0, %c0_0] : memref<128x128xf32, #tpu.memory_space<vmem>>, vector<128x128xf32>
    %cst = arith.constant 0.000000e+00 : f32
    %1 = vector.broadcast %cst : f32 to vector<128x128xf32>
    %2 = arith.maximumf %0, %1 : vector<128x128xf32>
    %3 = math.absf %0 : vector<128x128xf32>
    %cst_1 = arith.constant 0.000000e+00 : f32
    %4 = vector.broadcast %cst_1 : f32 to vector<128x128xf32>
    %5 = arith.subf %4, %3 : vector<128x128xf32>
    %6 = math.exp %5 : vector<128x128xf32>
    %7 = math.log1p %6 : vector<128x128xf32>
    %8 = arith.addf %2, %7 : vector<128x128xf32>
    %c0_2 = arith.constant 0 : index
    %c0_3 = arith.constant 0 : index
    %9 = vector.load %arg1[%c0_2, %c0_3] : memref<128x128xf32, #tpu.memory_space<vmem>>, vector<128x128xf32>
    %c0_4 = arith.constant 0 : index
    %c0_5 = arith.constant 0 : index
    %10 = vector.load %arg3[%c0_4, %c0_5] : memref<128x128xf32, #tpu.memory_space<vmem>>, vector<128x128xf32>
    %11 = arith.mulf %10, %8 : vector<128x128xf32>
    %12 = arith.addf %9, %11 : vector<128x128xf32>
    %13 = arith.truncf %12 : vector<128x128xf32> to vector<128x128xbf16>
    %c0_6 = arith.constant 0 : index
    %c0_7 = arith.constant 0 : index
    %14 = vector.load %arg7[%c0_6, %c0_7] : memref<128x128xbf16, #tpu.memory_space<vmem>>, vector<128x128xbf16>
    tpu.vector_store %arg7[%c0_6, %c0_7], %13 {strides = array<i32>} : memref<128x128xbf16, #tpu.memory_space<vmem>>, vector<128x128xbf16>,
    %c0_i32 = arith.constant 0 : i32
    %15 = arith.cmpi eq, %arg0, %c0_i32 : i32
    %16 = arith.extui %15 : i1 to i32
    %c0_i32_8 = arith.constant 0 : i32
    %17 = arith.cmpi ne, %16, %c0_i32_8 : i32
    scf.if %17 {
      %c0_9 = arith.constant 0 : index
      %c0_10 = arith.constant 0 : index
      %18 = vector.load %arg5[%c0_9, %c0_10] : memref<1x128xf32, #tpu.memory_space<vmem>>, vector<1x128xf32>
      %cst_11 = arith.constant 0.000000e+00 : f32
      %19 = vector.broadcast %cst_11 : f32 to vector<1x128xf32>
      %20 = arith.maximumf %18, %19 : vector<1x128xf32>
      %21 = math.absf %18 : vector<1x128xf32>
      %cst_12 = arith.constant 0.000000e+00 : f32
      %22 = vector.broadcast %cst_12 : f32 to vector<1x128xf32>
      %23 = arith.subf %22, %21 : vector<1x128xf32>
      %24 = math.exp %23 : vector<1x128xf32>
      %25 = math.log1p %24 : vector<1x128xf32>
      %26 = arith.addf %20, %25 : vector<1x128xf32>
      %c0_13 = arith.constant 0 : index
      %c0_14 = arith.constant 0 : index
      %27 = vector.load %arg4[%c0_13, %c0_14] : memref<1x128xf32, #tpu.memory_space<vmem>>, vector<1x128xf32>
      %c0_15 = arith.constant 0 : index
      %c0_16 = arith.constant 0 : index
      %28 = vector.load %arg6[%c0_15, %c0_16] : memref<1x128xf32, #tpu.memory_space<vmem>>, vector<1x128xf32>
      %29 = arith.mulf %28, %26 : vector<1x128xf32>
      %30 = arith.addf %27, %29 : vector<1x128xf32>
      %c0_17 = arith.constant 0 : index
      %c0_18 = arith.constant 0 : index
      %31 = vector.load %arg8[%c0_17, %c0_18] : memref<1x128xf32, #tpu.memory_space<vmem>>, vector<1x128xf32>
      tpu.vector_store %arg8[%c0_17, %c0_18], %30 {strides = array<i32>} : memref<1x128xf32, #tpu.memory_space<vmem>>, vector<1x128xf32>,
    } else {
    }
    return
  }
  func.func @transform_0(%arg0: i32) -> (i32, i32) {
    %c0_i32 = arith.constant 0 : i32
    %c0_i32_0 = arith.constant 0 : i32
    return %arg0, %c0_i32 : i32, i32
  }
  func.func @transform_1(%arg0: i32) -> (i32, i32) {
    %c0_i32 = arith.constant 0 : i32
    %c0_i32_0 = arith.constant 0 : i32
    return %arg0, %c0_i32 : i32, i32
  }
  func.func @transform_2(%arg0: i32) -> (i32, i32) {
    %c0_i32 = arith.constant 0 : i32
    %c0_i32_0 = arith.constant 0 : i32
    return %arg0, %c0_i32 : i32, i32
  }
  func.func @transform_3(%arg0: i32) -> (i32, i32) {
    %c0_i32 = arith.constant 0 : i32
    %c0_i32_0 = arith.constant 0 : i32
    %c0_i32_1 = arith.constant 0 : i32
    return %c0_i32, %c0_i32_0 : i32, i32
  }
  func.func @transform_4(%arg0: i32) -> (i32, i32) {
    %c0_i32 = arith.constant 0 : i32
    %c0_i32_0 = arith.constant 0 : i32
    %c0_i32_1 = arith.constant 0 : i32
    return %c0_i32, %c0_i32_0 : i32, i32
  }
  func.func @transform_5(%arg0: i32) -> (i32, i32) {
    %c0_i32 = arith.constant 0 : i32
    %c0_i32_0 = arith.constant 0 : i32
    %c0_i32_1 = arith.constant 0 : i32
    return %c0_i32, %c0_i32_0 : i32, i32
  }
  func.func @transform_6(%arg0: i32) -> (i32, i32) {
    %c0_i32 = arith.constant 0 : i32
    %c0_i32_0 = arith.constant 0 : i32
    return %arg0, %c0_i32 : i32, i32
  }
  func.func @transform_7(%arg0: i32) -> (i32, i32) {
    %c0_i32 = arith.constant 0 : i32
    %c0_i32_0 = arith.constant 0 : i32
    %c0_i32_1 = arith.constant 0 : i32
    return %c0_i32, %c0_i32_0 : i32, i32
  }
}

</mosaic_0001>

<llo_original>
// kernel: tpu_custom_call.1
$region0: #{tpu_custom_call.1}
  #allocation0 [shape = 'u32[]', space=smem, size = 0x4, offset = 0x4, fixed_abs, tag = 'smem constant byte address 0x4 - core index']
  #allocation1 [shape = 'u32[72,128]{1,0:T(1,128)}', space=vmem, size = 0x9000, scoped, tag = 'internal scratch']
  %s0 = inlined_call_operand.hbm [shape: f32[128,128], index: 0, kind: input, shape index: {}]
  %s1 = inlined_call_operand.hbm [shape: f32[128,128], index: 1, kind: input, shape index: {}]
  %s2 = inlined_call_operand.hbm [shape: f32[128,128], index: 2, kind: input, shape index: {}]
  %s3 = inlined_call_operand.vmem [shape: f32[1,128], index: 3, kind: input, shape index: {}]
  %s4 = inlined_call_operand.vmem [shape: f32[1,128], index: 4, kind: input, shape index: {}]
  %s5 = inlined_call_operand.vmem [shape: f32[1,128], index: 5, kind: input, shape index: {}]
  %s6 = inlined_call_operand.hbm [shape: bf16[128,128], index: 6, kind: output, shape index: {0}]
  %s7 = inlined_call_operand.hbm [shape: f32[1,128], index: 7, kind: output, shape index: {1}]
  %8 = xla_tuple %s6, %s7
  %s9 = sld [smem:[#allocation0]]
  $region58: #{tpu_custom_call.1} parent=0
    _
  %s11 = ssub.s32 1, %s9
  %s12 = scalar_select 0, %s11, %s9
  $region1: #{tpu_custom_call.1} parent=0
    #allocation2 [shape = 'u8[65536]{0}', space=vmem, size = 0x10000, scoped, tag = 'input window, operand 0, single buffered']
    #allocation3 [shape = 's32[1]{0}', space=sflag, size = 0x4, scoped, tag = 'scoped memory for tpu_custom_call.1']
    #allocation4 [shape = 's32[1]{0}', space=sflag, size = 0x4, scoped, tag = 'scoped memory for tpu_custom_call.1']
    #allocation5 [shape = 'u8[65536]{0}', space=vmem, size = 0x10000, scoped, tag = 'input window, operand 1, single buffered']
    #allocation6 [shape = 's32[1]{0}', space=sflag, size = 0x4, scoped, tag = 'scoped memory for tpu_custom_call.1']
    #allocation7 [shape = 'u8[65536]{0}', space=vmem, size = 0x10000, scoped, tag = 'input window, operand 2, single buffered']
    #allocation8 [shape = 'u8[32768]{0}', space=vmem, size = 0x8000, scoped, tag = 'output window, operand 0, single buffered']
    #allocation9 [shape = 'u8[512]{0}', space=vmem, size = 0x400, scoped, tag = 'output window, operand 1, single buffered']
    #allocation10 [shape = 's32[1]{0}', space=sflag, size = 0x4, scoped, tag = 'scoped memory for tpu_custom_call.1']
    %13 = vsyncpa [#allocation3], 0
    %14 = vsyncpa [#allocation6], 0
    %15 = vsyncpa [#allocation4], 0
    %16 = vsyncpa [#allocation10], 0
    // Predicated region
    $region2: #{tpu_custom_call.1} parent=1 // pred_check
      _
    $region3: #{tpu_custom_call.1} parent=1 // pred_check_branch
      %18 = sbr.rel (0) target = $region5
    $region4: #{tpu_custom_call.1} parent=1 // pred_region
      %20 = vsyncadd [#allocation3], 0
      %s21 = sshll.u32 %s0, 4
      %s22 = int_to_ptr.hbm [resolvable:$true] %s21
      %s23 = sshll.u32 [#allocation2], 4
      %s24 = int_to_ptr.vmem [resolvable:$true] %s23
      %29 = dma.hbm_to_vmem [thread:$0]  %s22, 2048, %s24, [#allocation3], 128, 128, 8
    $region5: #{tpu_custom_call.1} parent=1 // pred_fallthru
      _
    // Predicated region
    $region6: #{tpu_custom_call.1} parent=1 // pred_check
      _
    $region7: #{tpu_custom_call.1} parent=1 // pred_check_branch
      %31 = sbr.rel (0) target = $region9
    $region8: #{tpu_custom_call.1} parent=1 // pred_region
      %33 = vsyncadd [#allocation6], 0
      %s34 = sshll.u32 %s1, 4
      %s35 = int_to_ptr.hbm [resolvable:$true] %s34
      %s36 = sshll.u32 [#allocation5], 4
      %s37 = int_to_ptr.vmem [resolvable:$true] %s36
      %42 = dma.hbm_to_vmem [thread:$0]  %s35, 2048, %s37, [#allocation6], 128, 128, 8
    $region9: #{tpu_custom_call.1} parent=1 // pred_fallthru
      _
    // Predicated region
    $region10: #{tpu_custom_call.1} parent=1 // pred_check
      _
    $region11: #{tpu_custom_call.1} parent=1 // pred_check_branch
      %44 = sbr.rel (0) target = $region13
    $region12: #{tpu_custom_call.1} parent=1 // pred_region
      %46 = vsyncadd [#allocation6], 0
      %s47 = sshll.u32 %s2, 4
      %s48 = int_to_ptr.hbm [resolvable:$true] %s47
      %s49 = sshll.u32 [#allocation7], 4
      %s50 = int_to_ptr.vmem [resolvable:$true] %s49
      %55 = dma.hbm_to_vmem [thread:$0]  %s48, 2048, %s50, [#allocation6], 128, 128, 8
    $region13: #{tpu_custom_call.1} parent=1 // pred_fallthru
      _
    // Predicated region
    $region14: #{tpu_custom_call.1} parent=1 // pred_check
      _
    $region15: #{tpu_custom_call.1} parent=1 // pred_check_branch
      %57 = sbr.rel (0) target = $region17
    $region16: #{tpu_custom_call.1} parent=1 // pred_region
      _
    $region17: #{tpu_custom_call.1} parent=1 // pred_fallthru
      _
    // Predicated region
    $region18: #{tpu_custom_call.1} parent=1 // pred_check
      _
    $region19: #{tpu_custom_call.1} parent=1 // pred_check_branch
      %59 = sbr.rel (0) target = $region21
    $region20: #{tpu_custom_call.1} parent=1 // pred_region
      _
    $region21: #{tpu_custom_call.1} parent=1 // pred_fallthru
      _
    // Predicated region
    $region22: #{tpu_custom_call.1} parent=1 // pred_check
      _
    $region23: #{tpu_custom_call.1} parent=1 // pred_check_branch
      %61 = sbr.rel (0) target = $region25
    $region24: #{tpu_custom_call.1} parent=1 // pred_region
      _
    $region25: #{tpu_custom_call.1} parent=1 // pred_fallthru
      _
    // Predicated region
    $region26: #{tpu_custom_call.1} parent=1 // pred_check
      _
    $region27: #{tpu_custom_call.1} parent=1 // pred_check_branch
      %63 = sbr.rel (0) target = $region29
    $region28: #{tpu_custom_call.1} parent=1 // pred_region
      %65 = dma.done [#allocation3], 2048
    $region29: #{tpu_custom_call.1} parent=1 // pred_fallthru
      _
    // Predicated region
    $region30: #{tpu_custom_call.1} parent=1 // pred_check
      _
    $region31: #{tpu_custom_call.1} parent=1 // pred_check_branch
      %67 = sbr.rel (0) target = $region33
    $region32: #{tpu_custom_call.1} parent=1 // pred_region
      %69 = dma.done [#allocation6], 2048
    $region33: #{tpu_custom_call.1} parent=1 // pred_fallthru
      _
    // Predicated region
    $region34: #{tpu_custom_call.1} parent=1 // pred_check
      _
    $region35: #{tpu_custom_call.1} parent=1 // pred_check_branch
      %71 = sbr.rel (0) target = $region37
    $region36: #{tpu_custom_call.1} parent=1 // pred_region
      %73 = dma.done [#allocation6], 2048
    $region37: #{tpu_custom_call.1} parent=1 // pred_fallthru
      _
    %v74 = vld [vmem:[#allocation5] sm:$0xff]
    %v75 = vld [vmem:[#allocation5 + $0x8] sm:$0xff]
    %v76 = vld [vmem:[#allocation5 + $0x10] sm:$0xff]
    %v77 = vld [vmem:[#allocation5 + $0x18] sm:$0xff]
    %v78 = vld [vmem:[#allocation5 + $0x20] sm:$0xff]
    %v79 = vld [vmem:[#allocation5 + $0x28] sm:$0xff]
    %v80 = vld [vmem:[#allocation5 + $0x30] sm:$0xff]
    %v81 = vld [vmem:[#allocation5 + $0x38] sm:$0xff]
    %v82 = vld [vmem:[#allocation5 + $0x40] sm:$0xff]
    %v83 = vld [vmem:[#allocation5 + $0x48] sm:$0xff]
    %v84 = vld [vmem:[#allocation5 + $0x50] sm:$0xff]
    %v85 = vld [vmem:[#allocation5 + $0x58] sm:$0xff]
    %v86 = vld [vmem:[#allocation5 + $0x60] sm:$0xff]
    %v87 = vld [vmem:[#allocation5 + $0x68] sm:$0xff]
    %v88 = vld [vmem:[#allocation5 + $0x70] sm:$0xff]
    %v89 = vld [vmem:[#allocation5 + $0x78] sm:$0xff]
    %v90 = vmax.f32 %v74, 0.0
    %v91 = vmax.f32 %v75, 0.0
    %v92 = vmax.f32 %v76, 0.0
    %v93 = vmax.f32 %v77, 0.0
    %v94 = vmax.f32 %v78, 0.0
    %v95 = vmax.f32 %v79, 0.0
    %v96 = vmax.f32 %v80, 0.0
    %v97 = vmax.f32 %v81, 0.0
    %v98 = vmax.f32 %v82, 0.0
    %v99 = vmax.f32 %v83, 0.0
    %v100 = vmax.f32 %v84, 0.0
    %v101 = vmax.f32 %v85, 0.0
    %v102 = vmax.f32 %v86, 0.0
    %v103 = vmax.f32 %v87, 0.0
    %v104 = vmax.f32 %v88, 0.0
    %v105 = vmax.f32 %v89, 0.0
    %v106 = vand.u32 2147483647, %v74
    %v107 = vand.u32 2147483647, %v75
    %v108 = vand.u32 2147483647, %v76
    %v109 = vand.u32 2147483647, %v77
    %v110 = vand.u32 2147483647, %v78
    %v111 = vand.u32 2147483647, %v79
    %v112 = vand.u32 2147483647, %v80
    %v113 = vand.u32 2147483647, %v81
    %v114 = vand.u32 2147483647, %v82
    %v115 = vand.u32 2147483647, %v83
    %v116 = vand.u32 2147483647, %v84
    %v117 = vand.u32 2147483647, %v85
    %v118 = vand.u32 2147483647, %v86
    %v119 = vand.u32 2147483647, %v87
    %v120 = vand.u32 2147483647, %v88
    %v121 = vand.u32 2147483647, %v89
    %v122 = vsub.f32 0.0, %v106
    %v123 = vsub.f32 0.0, %v107
    %v124 = vsub.f32 0.0, %v108
    %v125 = vsub.f32 0.0, %v109
    %v126 = vsub.f32 0.0, %v110
    %v127 = vsub.f32 0.0, %v111
    %v128 = vsub.f32 0.0, %v112
    %v129 = vsub.f32 0.0, %v113
    %v130 = vsub.f32 0.0, %v114
    %v131 = vsub.f32 0.0, %v115
    %v132 = vsub.f32 0.0, %v116
    %v133 = vsub.f32 0.0, %v117
    %v134 = vsub.f32 0.0, %v118
    %v135 = vsub.f32 0.0, %v119
    %v136 = vsub.f32 0.0, %v120
    %v137 = vsub.f32 0.0, %v121
    %v138 = vmul.f32 %v122, 1.442695
    %v139 = vpow.pop %v138
    %v140 = vmul.f32 %v123, 1.442695
    %v141 = vpow.pop %v140
    %v142 = vmul.f32 %v124, 1.442695
    %v143 = vpow.pop %v142
    %v144 = vmul.f32 %v125, 1.442695
    %v145 = vpow.pop %v144
    %v146 = vmul.f32 %v126, 1.442695
    %v147 = vpow.pop %v146
    %v148 = vmul.f32 %v127, 1.442695
    %v149 = vpow.pop %v148
    %v150 = vmul.f32 %v128, 1.442695
    %v151 = vpow.pop %v150
    %v152 = vmul.f32 %v129, 1.442695
    %v153 = vpow.pop %v152
    %v154 = vmul.f32 %v130, 1.442695
    %v155 = vpow.pop %v154
    %v156 = vmul.f32 %v131, 1.442695
    %v157 = vpow.pop %v156
    %v158 = vmul.f32 %v132, 1.442695
    %v159 = vpow.pop %v158
    %v160 = vmul.f32 %v133, 1.442695
    %v161 = vpow.pop %v160
    %v162 = vmul.f32 %v134, 1.442695
    %v163 = vpow.pop %v162
    %v164 = vmul.f32 %v135, 1.442695
    %v165 = vpow.pop %v164
    %v166 = vmul.f32 %v136, 1.442695
    %v167 = vpow.pop %v166
    %v168 = vmul.f32 %v137, 1.442695
    %v169 = vpow.pop %v168
    %v170 = vadd.f32 %v139, 1.0
    %v171 = vlog2.pop %v170
    %v172 = vmul.f32 %v171, 0.6931472
    %v173 = vmul.f32 -0.5, %v139
    %v174 = vadd.f32 %v173, 1.0
    %v175 = vmul.f32 %v174, %v139
    %v176 = vand.u32 2147483647, %v139
    %vm177 = vcmp.lt.f32.partialorder %v176, 0.0004427343
    %v178 = vsel %vm177, %v175, %v172
    %v179 = vadd.f32 %v141, 1.0
    %v180 = vlog2.pop %v179
    %v181 = vmul.f32 %v180, 0.6931472
    %v182 = vmul.f32 -0.5, %v141
    %v183 = vadd.f32 %v182, 1.0
    %v184 = vmul.f32 %v183, %v141
    %v185 = vand.u32 2147483647, %v141
    %vm186 = vcmp.lt.f32.partialorder %v185, 0.0004427343
    %v187 = vsel %vm186, %v184, %v181
    %v188 = vadd.f32 %v143, 1.0
    %v189 = vlog2.pop %v188
    %v190 = vmul.f32 %v189, 0.6931472
    %v191 = vmul.f32 -0.5, %v143
    %v192 = vadd.f32 %v191, 1.0
    %v193 = vmul.f32 %v192, %v143
    %v194 = vand.u32 2147483647, %v143
    %vm195 = vcmp.lt.f32.partialorder %v194, 0.0004427343
    %v196 = vsel %vm195, %v193, %v190
    %v197 = vadd.f32 %v145, 1.0
    %v198 = vlog2.pop %v197
    %v199 = vmul.f32 %v198, 0.6931472
    %v200 = vmul.f32 -0.5, %v145
    %v201 = vadd.f32 %v200, 1.0
    %v202 = vmul.f32 %v201, %v145
    %v203 = vand.u32 2147483647, %v145
    %vm204 = vcmp.lt.f32.partialorder %v203, 0.0004427343
    %v205 = vsel %vm204, %v202, %v199
    %v206 = vadd.f32 %v147, 1.0
    %v207 = vlog2.pop %v206
    %v208 = vmul.f32 %v207, 0.6931472
    %v209 = vmul.f32 -0.5, %v147
    %v210 = vadd.f32 %v209, 1.0
    %v211 = vmul.f32 %v210, %v147
    %v212 = vand.u32 2147483647, %v147
    %vm213 = vcmp.lt.f32.partialorder %v212, 0.0004427343
    %v214 = vsel %vm213, %v211, %v208
    %v215 = vadd.f32 %v149, 1.0
    %v216 = vlog2.pop %v215
    %v217 = vmul.f32 %v216, 0.6931472
    %v218 = vmul.f32 -0.5, %v149
    %v219 = vadd.f32 %v218, 1.0
    %v220 = vmul.f32 %v219, %v149
    %v221 = vand.u32 2147483647, %v149
    %vm222 = vcmp.lt.f32.partialorder %v221, 0.0004427343
    %v223 = vsel %vm222, %v220, %v217
    %v224 = vadd.f32 %v151, 1.0
    %v225 = vlog2.pop %v224
    %v226 = vmul.f32 %v225, 0.6931472
    %v227 = vmul.f32 -0.5, %v151
    %v228 = vadd.f32 %v227, 1.0
    %v229 = vmul.f32 %v228, %v151
    %v230 = vand.u32 2147483647, %v151
    %vm231 = vcmp.lt.f32.partialorder %v230, 0.0004427343
    %v232 = vsel %vm231, %v229, %v226
    %v233 = vadd.f32 %v153, 1.0
    %v234 = vlog2.pop %v233
    %v235 = vmul.f32 %v234, 0.6931472
    %v236 = vmul.f32 -0.5, %v153
    %v237 = vadd.f32 %v236, 1.0
    %v238 = vmul.f32 %v237, %v153
    %v239 = vand.u32 2147483647, %v153
    %vm240 = vcmp.lt.f32.partialorder %v239, 0.0004427343
    %v241 = vsel %vm240, %v238, %v235
    %v242 = vadd.f32 %v155, 1.0
    %v243 = vlog2.pop %v242
    %v244 = vmul.f32 %v243, 0.6931472
    %v245 = vmul.f32 -0.5, %v155
    %v246 = vadd.f32 %v245, 1.0
    %v247 = vmul.f32 %v246, %v155
    %v248 = vand.u32 2147483647, %v155
    %vm249 = vcmp.lt.f32.partialorder %v248, 0.0004427343
    %v250 = vsel %vm249, %v247, %v244
    %v251 = vadd.f32 %v157, 1.0
    %v252 = vlog2.pop %v251
    %v253 = vmul.f32 %v252, 0.6931472
    %v254 = vmul.f32 -0.5, %v157
    %v255 = vadd.f32 %v254, 1.0
    %v256 = vmul.f32 %v255, %v157
    %v257 = vand.u32 2147483647, %v157
    %vm258 = vcmp.lt.f32.partialorder %v257, 0.0004427343
    %v259 = vsel %vm258, %v256, %v253
    %v260 = vadd.f32 %v159, 1.0
    %v261 = vlog2.pop %v260
    %v262 = vmul.f32 %v261, 0.6931472
    %v263 = vmul.f32 -0.5, %v159
    %v264 = vadd.f32 %v263, 1.0
    %v265 = vmul.f32 %v264, %v159
    %v266 = vand.u32 2147483647, %v159
    %vm267 = vcmp.lt.f32.partialorder %v266, 0.0004427343
    %v268 = vsel %vm267, %v265, %v262
    %v269 = vadd.f32 %v161, 1.0
    %v270 = vlog2.pop %v269
    %v271 = vmul.f32 %v270, 0.6931472
    %v272 = vmul.f32 -0.5, %v161
    %v273 = vadd.f32 %v272, 1.0
    %v274 = vmul.f32 %v273, %v161
    %v275 = vand.u32 2147483647, %v161
    %vm276 = vcmp.lt.f32.partialorder %v275, 0.0004427343
    %v277 = vsel %vm276, %v274, %v271
    %v278 = vadd.f32 %v163, 1.0
    %v279 = vlog2.pop %v278
    %v280 = vmul.f32 %v279, 0.6931472
    %v281 = vmul.f32 -0.5, %v163
    %v282 = vadd.f32 %v281, 1.0
    %v283 = vmul.f32 %v282, %v163
    %v284 = vand.u32 2147483647, %v163
    %vm285 = vcmp.lt.f32.partialorder %v284, 0.0004427343
    %v286 = vsel %vm285, %v283, %v280
    %v287 = vadd.f32 %v165, 1.0
    %v288 = vlog2.pop %v287
    %v289 = vmul.f32 %v288, 0.6931472
    %v290 = vmul.f32 -0.5, %v165
    %v291 = vadd.f32 %v290, 1.0
    %v292 = vmul.f32 %v291, %v165
    %v293 = vand.u32 2147483647, %v165
    %vm294 = vcmp.lt.f32.partialorder %v293, 0.0004427343
    %v295 = vsel %vm294, %v292, %v289
    %v296 = vadd.f32 %v167, 1.0
    %v297 = vlog2.pop %v296
    %v298 = vmul.f32 %v297, 0.6931472
    %v299 = vmul.f32 -0.5, %v167
    %v300 = vadd.f32 %v299, 1.0
    %v301 = vmul.f32 %v300, %v167
    %v302 = vand.u32 2147483647, %v167
    %vm303 = vcmp.lt.f32.partialorder %v302, 0.0004427343
    %v304 = vsel %vm303, %v301, %v298
    %v305 = vadd.f32 %v169, 1.0
    %v306 = vlog2.pop %v305
    %v307 = vmul.f32 %v306, 0.6931472
    %v308 = vmul.f32 -0.5, %v169
    %v309 = vadd.f32 %v308, 1.0
    %v310 = vmul.f32 %v309, %v169
    %v311 = vand.u32 2147483647, %v169
    %vm312 = vcmp.lt.f32.partialorder %v311, 0.0004427343
    %v313 = vsel %vm312, %v310, %v307
    %v314 = vadd.f32 %v90, %v178
    %v315 = vadd.f32 %v91, %v187
    %v316 = vadd.f32 %v92, %v196
    %v317 = vadd.f32 %v93, %v205
    %v318 = vadd.f32 %v94, %v214
    %v319 = vadd.f32 %v95, %v223
    %v320 = vadd.f32 %v96, %v232
    %v321 = vadd.f32 %v97, %v241
    %v322 = vadd.f32 %v98, %v250
    %v323 = vadd.f32 %v99, %v259
    %v324 = vadd.f32 %v100, %v268
    %v325 = vadd.f32 %v101, %v277
    %v326 = vadd.f32 %v102, %v286
    %v327 = vadd.f32 %v103, %v295
    %v328 = vadd.f32 %v104, %v304
    %v329 = vadd.f32 %v105, %v313
    %v330 = vld [vmem:[#allocation2] sm:$0xff]
    %v331 = vld [vmem:[#allocation2 + $0x8] sm:$0xff]
    %v332 = vld [vmem:[#allocation2 + $0x10] sm:$0xff]
    %v333 = vld [vmem:[#allocation2 + $0x18] sm:$0xff]
    %v334 = vld [vmem:[#allocation2 + $0x20] sm:$0xff]
    %v335 = vld [vmem:[#allocation2 + $0x28] sm:$0xff]
    %v336 = vld [vmem:[#allocation2 + $0x30] sm:$0xff]
    %v337 = vld [vmem:[#allocation2 + $0x38] sm:$0xff]
    %v338 = vld [vmem:[#allocation2 + $0x40] sm:$0xff]
    %v339 = vld [vmem:[#allocation2 + $0x48] sm:$0xff]
    %v340 = vld [vmem:[#allocation2 + $0x50] sm:$0xff]
    %v341 = vld [vmem:[#allocation2 + $0x58] sm:$0xff]
    %v342 = vld [vmem:[#allocation2 + $0x60] sm:$0xff]
    %v343 = vld [vmem:[#allocation2 + $0x68] sm:$0xff]
    %v344 = vld [vmem:[#allocation2 + $0x70] sm:$0xff]
    %v345 = vld [vmem:[#allocation2 + $0x78] sm:$0xff]
    %v346 = vld [vmem:[#allocation7] sm:$0xff]
    %v347 = vld [vmem:[#allocation7 + $0x8] sm:$0xff]
    %v348 = vld [vmem:[#allocation7 + $0x10] sm:$0xff]
    %v349 = vld [vmem:[#allocation7 + $0x18] sm:$0xff]
    %v350 = vld [vmem:[#allocation7 + $0x20] sm:$0xff]
    %v351 = vld [vmem:[#allocation7 + $0x28] sm:$0xff]
    %v352 = vld [vmem:[#allocation7 + $0x30] sm:$0xff]
    %v353 = vld [vmem:[#allocation7 + $0x38] sm:$0xff]
    %v354 = vld [vmem:[#allocation7 + $0x40] sm:$0xff]
    %v355 = vld [vmem:[#allocation7 + $0x48] sm:$0xff]
    %v356 = vld [vmem:[#allocation7 + $0x50] sm:$0xff]
    %v357 = vld [vmem:[#allocation7 + $0x58] sm:$0xff]
    %v358 = vld [vmem:[#allocation7 + $0x60] sm:$0xff]
    %v359 = vld [vmem:[#allocation7 + $0x68] sm:$0xff]
    %v360 = vld [vmem:[#allocation7 + $0x70] sm:$0xff]
    %v361 = vld [vmem:[#allocation7 + $0x78] sm:$0xff]
    %v362 = vmul.f32 %v346, %v314
    %v363 = vmul.f32 %v347, %v315
    %v364 = vmul.f32 %v348, %v316
    %v365 = vmul.f32 %v349, %v317
    %v366 = vmul.f32 %v350, %v318
    %v367 = vmul.f32 %v351, %v319
    %v368 = vmul.f32 %v352, %v320
    %v369 = vmul.f32 %v353, %v321
    %v370 = vmul.f32 %v354, %v322
    %v371 = vmul.f32 %v355, %v323
    %v372 = vmul.f32 %v356, %v324
    %v373 = vmul.f32 %v357, %v325
    %v374 = vmul.f32 %v358, %v326
    %v375 = vmul.f32 %v359, %v327
    %v376 = vmul.f32 %v360, %v328
    %v377 = vmul.f32 %v361, %v329
    %v378 = vadd.f32 %v330, %v362
    %v379 = vadd.f32 %v331, %v363
    %v380 = vadd.f32 %v332, %v364
    %v381 = vadd.f32 %v333, %v365
    %v382 = vadd.f32 %v334, %v366
    %v383 = vadd.f32 %v335, %v367
    %v384 = vadd.f32 %v336, %v368
    %v385 = vadd.f32 %v337, %v369
    %v386 = vadd.f32 %v338, %v370
    %v387 = vadd.f32 %v339, %v371
    %v388 = vadd.f32 %v340, %v372
    %v389 = vadd.f32 %v341, %v373
    %v390 = vadd.f32 %v342, %v374
    %v391 = vadd.f32 %v343, %v375
    %v392 = vadd.f32 %v344, %v376
    %v393 = vadd.f32 %v345, %v377
    %v394 = vpack.c.bf16 %v378, %v378
    %v395 = vpack.c.bf16 %v379, %v379
    %v396 = vpack.c.bf16 %v380, %v380
    %v397 = vpack.c.bf16 %v381, %v381
    %v398 = vpack.c.bf16 %v382, %v382
    %v399 = vpack.c.bf16 %v383, %v383
    %v400 = vpack.c.bf16 %v384, %v384
    %v401 = vpack.c.bf16 %v385, %v385
    %v402 = vpack.c.bf16 %v386, %v386
    %v403 = vpack.c.bf16 %v387, %v387
    %v404 = vpack.c.bf16 %v388, %v388
    %v405 = vpack.c.bf16 %v389, %v389
    %v406 = vpack.c.bf16 %v390, %v390
    %v407 = vpack.c.bf16 %v391, %v391
    %v408 = vpack.c.bf16 %v392, %v392
    %v409 = vpack.c.bf16 %v393, %v393
    %410 = vst [vmem:[#allocation8] sm:$0xf] %v394
    %411 = vst [vmem:[#allocation8 + $0x4] sm:$0xf] %v395
    %412 = vst [vmem:[#allocation8 + $0x8] sm:$0xf] %v396
    %413 = vst [vmem:[#allocation8 + $0xc] sm:$0xf] %v397
    %414 = vst [vmem:[#allocation8 + $0x10] sm:$0xf] %v398
    %415 = vst [vmem:[#allocation8 + $0x14] sm:$0xf] %v399
    %416 = vst [vmem:[#allocation8 + $0x18] sm:$0xf] %v400
    %417 = vst [vmem:[#allocation8 + $0x1c] sm:$0xf] %v401
    %418 = vst [vmem:[#allocation8 + $0x20] sm:$0xf] %v402
    %419 = vst [vmem:[#allocation8 + $0x24] sm:$0xf] %v403
    %420 = vst [vmem:[#allocation8 + $0x28] sm:$0xf] %v404
    %421 = vst [vmem:[#allocation8 + $0x2c] sm:$0xf] %v405
    %422 = vst [vmem:[#allocation8 + $0x30] sm:$0xf] %v406
    %423 = vst [vmem:[#allocation8 + $0x34] sm:$0xf] %v407
    %424 = vst [vmem:[#allocation8 + $0x38] sm:$0xf] %v408
    %425 = vst [vmem:[#allocation8 + $0x3c] sm:$0xf] %v409
    %p426 = scmp.eq.s32.totalorder 0, 0
    // Predicated region
    $region38: #{tpu_custom_call.1} parent=1 // pred_check
      %p427 = pneg %p426
    $region39: #{tpu_custom_call.1} parent=1 // pred_check_branch
      %429 = sbr.rel (%p427) target = $region41
    $region40: #{tpu_custom_call.1} parent=1 // pred_region
      %v430 = vld [vmem:[%s4] sm:$0x1]
      %v431 = vmax.f32 %v430, 0.0
      %v432 = vand.u32 2147483647, %v430
      %v433 = vsub.f32 0.0, %v432
      %v434 = vmul.f32 %v433, 1.442695
      %v435 = vpow.pop %v434
      %v436 = vadd.f32 %v435, 1.0
      %v437 = vlog2.pop %v436
      %v438 = vmul.f32 %v437, 0.6931472
      %v439 = vmul.f32 -0.5, %v435
      %v440 = vadd.f32 %v439, 1.0
      %v441 = vmul.f32 %v440, %v435
      %v442 = vand.u32 2147483647, %v435
      %vm443 = vcmp.lt.f32.partialorder %v442, 0.0004427343
      %v444 = vsel %vm443, %v441, %v438
      %v445 = vadd.f32 %v431, %v444
      %v446 = vld [vmem:[%s3] sm:$0x1]
      %v447 = vld [vmem:[%s5] sm:$0x1]
      %v448 = vmul.f32 %v447, %v445
      %v449 = vadd.f32 %v446, %v448
      %450 = vst [vmem:[#allocation9] sm:$0x1] %v449
    $region41: #{tpu_custom_call.1} parent=1 // pred_fallthru
      _
    // Predicated region
    $region42: #{tpu_custom_call.1} parent=1 // pred_check
      _
    $region43: #{tpu_custom_call.1} parent=1 // pred_check_branch
      %452 = sbr.rel (0) target = $region45
    $region44: #{tpu_custom_call.1} parent=1 // pred_region
      %454 = vsyncadd [#allocation4], 0
      %s455 = sshll.u32 [#allocation8], 4
      %s456 = int_to_ptr.vmem [resolvable:$true] %s455
      %s457 = sshll.u32 %s6, 4
      %s458 = int_to_ptr.hbm [resolvable:$true] %s457
      %463 = dma.vmem_to_hbm [thread:$0]  %s456, 1024, %s458, [#allocation4], 64, 64, 4
    $region45: #{tpu_custom_call.1} parent=1 // pred_fallthru
      _
    // Predicated region
    $region46: #{tpu_custom_call.1} parent=1 // pred_check
      _
    $region47: #{tpu_custom_call.1} parent=1 // pred_check_branch
      %465 = sbr.rel (0) target = $region49
    $region48: #{tpu_custom_call.1} parent=1 // pred_region
      %467 = vsyncadd [#allocation10], 0
      %s469 = sshll.u32 [#allocation9], 4
      %s470 = int_to_ptr.vmem [resolvable:$true] %s469
      %s471 = sshll.u32 %s7, 4
      %s472 = int_to_ptr.hbm [resolvable:$true] %s471
      %474 = dma.vmem_to_hbm [thread:$0]  %s470, 16, %s472, [#allocation10]
    $region49: #{tpu_custom_call.1} parent=1 // pred_fallthru
      _
    // Predicated region
    $region50: #{tpu_custom_call.1} parent=1 // pred_check
      _
    $region51: #{tpu_custom_call.1} parent=1 // pred_check_branch
      %476 = sbr.rel (0) target = $region53
    $region52: #{tpu_custom_call.1} parent=1 // pred_region
      %478 = dma.done [#allocation4], 1024
    $region53: #{tpu_custom_call.1} parent=1 // pred_fallthru
      _
    // Predicated region
    $region54: #{tpu_custom_call.1} parent=1 // pred_check
      _
    $region55: #{tpu_custom_call.1} parent=1 // pred_check_branch
      %480 = sbr.rel (0) target = $region57
    $region56: #{tpu_custom_call.1} parent=1 // pred_region
      %482 = dma.done [#allocation10], 16
    $region57: #{tpu_custom_call.1} parent=1 // pred_fallthru
      _
    %483 = vsyncpa [#allocation3], 1
    %484 = vsyncpa [#allocation6], 1
    %485 = vsyncpa [#allocation4], 1
    %486 = vsyncpa [#allocation10], 1

</llo_original>
